<compile_context>
chip_gen: v6e
topology: v6e:2x2x1
jax: 0.10.0
libtpu: 0.0.40
codegen_flags: <defaults>
</compile_context>

<pallas_src>
import jax
import jax.numpy as jnp
import numpy as np
from jax.experimental import pallas as pl
from jax.experimental.pallas import tpu as pltpu


def identity(x):
    """The genuinely optimal Identity forward: a no-op at the JAX level."""
    return x


# ---------------------------------------------------------------------------
# Primary path: zero-traffic aliased no-op kernel.
# ---------------------------------------------------------------------------

def _identity_noop_kernel(x_ref, o_ref):
    # o_ref is the SAME HBM buffer as x_ref (input_output_aliases={0: 0}), so
    # the bytes are already in place.  No DMA, no compute: just pin a fake
    # read+write dependency so the aliased output counts as produced here.
    del x_ref
    pltpu.touch(o_ref)


def _identity_alias_noop(x):
    return pl.pallas_call(
        _identity_noop_kernel,
        out_shape=jax.ShapeDtypeStruct(x.shape, x.dtype),
        in_specs=[pl.BlockSpec(memory_space=pl.ANY)],
        out_specs=pl.BlockSpec(memory_space=pl.ANY),
        input_output_aliases={0: 0},
        compiler_params=pltpu.CompilerParams(has_side_effects=True),
    )(x)


# ---------------------------------------------------------------------------
# Fallback path: bounded, pipelined, aliased VMEM copy.
# ---------------------------------------------------------------------------

# Per-block budget: with default double-buffering on input and output
# (4 buffers total) ~2 MiB blocks stay well inside every generation's scoped
# VMEM default (16 MiB v5e / 32 MiB v6e / 32 MiB v7x), so no vmem_limit_bytes
# override is needed anywhere.
_MAX_BLOCK_BYTES = 2 * 1024 * 1024
# Below this the whole array is one block (no grid).  Kept small so mid-size
# arrays still get >=2 "parallel" blocks and both v7x TensorCores participate.
_SINGLE_BLOCK_BYTES = 512 * 1024


def _identity_copy_kernel(x_ref, o_ref):
    # Bare lane-dense VMEM copy; strictly HBM-bandwidth bound.
    o_ref[...] = x_ref[...]


def _sublane_multiple(dtype) -> int:
    # Sub-32-bit dtypes pack along sublanes: f32 -> 8, bf16 -> 16, int8 -> 32.
    itemsize = jnp.dtype(dtype).itemsize
    return max(8, 32 // max(itemsize, 1))


def _identity_copy(x):
    shape, dtype = x.shape, x.dtype
    itemsize = jnp.dtype(dtype).itemsize
    total_bytes = x.size * itemsize
    out_shape = jax.ShapeDtypeStruct(shape, dtype)

    if total_bytes <= _SINGLE_BLOCK_BYTES:
        # Whole array as one VMEM block; full-extent dims are always a legal
        # block shape, so no (8, 128) concerns regardless of alignment.
        return pl.pallas_call(
            _identity_copy_kernel,
            out_shape=out_shape,
            input_output_aliases={0: 0},
        )(x)

    if x.ndim == 1:
        # Large 1-D array: 128-aligned lane blocks, cdiv grid masks the tail.
        block_n = max(128, (_MAX_BLOCK_BYTES // itemsize) // 128 * 128)
        block_n = min(block_n, shape[0])
        spec = pl.BlockSpec((block_n,), lambda i: (i,))
        return pl.pallas_call(
            _identity_copy_kernel,
            out_shape=out_shape,
            grid=(pl.cdiv(shape[0], block_n),),
            in_specs=[spec],
            out_specs=spec,
            input_output_aliases={0: 0},
            compiler_params=pltpu.CompilerParams(
                dimension_semantics=("parallel",)),
        )(x)

    sublane = _sublane_multiple(dtype)
    W = shape[-1]
    H = shape[-2]
    lead = shape[:-2]
    nlead = len(lead)

    # Lane (last-dim) tile: full W when it fits the budget, otherwise a
    # multiple of 128 so block bytes stay bounded for arbitrarily wide arrays
    # (the cdiv grid masks the partial last lane-block).
    if W * itemsize * sublane <= _MAX_BLOCK_BYTES:
        block_w = W
    else:
        block_w = max(128, (_MAX_BLOCK_BYTES // (itemsize * sublane)) // 128 * 128)
        block_w = min(block_w, W)

    # Sublane (2nd-to-last dim) tile: sublane multiple, bounded by the budget.
    rows_budget = (_MAX_BLOCK_BYTES // (block_w * itemsize)) // sublane * sublane
    block_h = min(H, max(sublane, rows_budget))

    # Fold the innermost leading dim into the block when each (H, W) slab is
    # small, so blocks approach the ~2 MiB sweet spot instead of many tiny
    # slabs (NCHW-style shapes).
    # TODO(synk): fold across multiple leading dims if one level is not enough.
    slab_bytes = block_h * block_w * itemsize
    lead_fold = 1
    if nlead > 0 and block_h == H and block_w == W and slab_bytes < _MAX_BLOCK_BYTES:
        lead_fold = min(lead[-1], max(1, _MAX_BLOCK_BYTES // max(slab_bytes, 1)))

    block = (1,) * max(nlead - 1, 0)
    grid = tuple(lead[:-1])
    if nlead > 0:
        block = block + (lead_fold,)
        grid = grid + (pl.cdiv(lead[-1], lead_fold),)
    block = block + (block_h, block_w)
    grid = grid + (pl.cdiv(H, block_h), pl.cdiv(W, block_w))

    def index_map(*g):
        # One grid axis per block dim, in order.
        return g

    spec = pl.BlockSpec(block, index_map)
    return pl.pallas_call(
        _identity_copy_kernel,
        out_shape=out_shape,
        grid=grid,
        in_specs=[spec],
        out_specs=spec,
        input_output_aliases={0: 0},
        compiler_params=pltpu.CompilerParams(
            dimension_semantics=("parallel",) * len(grid)),
    )(x)


# ---------------------------------------------------------------------------
# Public entry point.
# ---------------------------------------------------------------------------

def identity_pallas(x):
    """Identity forward (y = x) realized as a Pallas TPU kernel.

    The primary path is a zero-traffic no-op over aliased HBM buffers; if that
    fails to lower on some backend, a bounded, pipelined, aliased VMEM copy is
    used instead.  (In production code the correct Identity is `identity(x)`:
    no kernel at all.)
    """
    if x.ndim == 0 or x.size == 0:
        return x
    try:
        return _identity_alias_noop(x)
    except Exception:
        return _identity_copy(x)


if __name__ == "__main__":
    key = jax.random.PRNGKey(0)
    # Small NCHW input consistent with typical usage: batch=2, channels=4, 16x16.
    x = jax.random.normal(key, (2, 4, 16, 16), dtype=jnp.float32)

    # Snapshot to host BEFORE the call: with input_output_aliases the output
    # buffer may be (a copy of) the input buffer.
    x_host = np.asarray(x)

    y = identity_pallas(x)
    y = jax.block_until_ready(y)

    assert y.shape == x_host.shape and y.dtype == x_host.dtype
    assert np.array_equal(np.asarray(y), x_host)
    print("KERNEL_OK")
</pallas_src>

<mosaic_0001>
module attributes {stable_mosaic.version = 11 : i64} {
  func.func @_identity_noop_kernel(%arg0: memref<2x4x16x16xf32, #tpu.memory_space<any>>, %arg1: memref<2x4x16x16xf32, #tpu.memory_space<any>>) attributes {dimension_semantics = [], scalar_prefetch = 0 : i64, scratch_operands = 0 : i64, tpu.core_type = #tpu.core_type<tc>} {
    return
  }
}

module attributes {stable_mosaic.version = 11 : i64} {
  func.func @_identity_copy_kernel(%arg0: memref<2x4x16x16xf32, #tpu.memory_space<vmem>>, %arg1: memref<2x4x16x16xf32, #tpu.memory_space<vmem>>) attributes {dimension_semantics = [], scalar_prefetch = 0 : i64, scratch_operands = 0 : i64, tpu.core_type = #tpu.core_type<tc>} {
    %c0 = arith.constant 0 : index
    %c0_0 = arith.constant 0 : index
    %c0_1 = arith.constant 0 : index
    %c0_2 = arith.constant 0 : index
    %0 = vector.load %arg0[%c0, %c0_0, %c0_1, %c0_2] : memref<2x4x16x16xf32, #tpu.memory_space<vmem>>, vector<2x4x16x16xf32>
    %c0_3 = arith.constant 0 : index
    %c0_4 = arith.constant 0 : index
    %c0_5 = arith.constant 0 : index
    %c0_6 = arith.constant 0 : index
    %1 = vector.load %arg1[%c0_3, %c0_4, %c0_5, %c0_6] : memref<2x4x16x16xf32, #tpu.memory_space<vmem>>, vector<2x4x16x16xf32>
    tpu.vector_store %arg1[%c0_3, %c0_4, %c0_5, %c0_6], %0 {strides = array<i32>} : memref<2x4x16x16xf32, #tpu.memory_space<vmem>>, vector<2x4x16x16xf32>,
    return
  }
}

</mosaic_0001>

<llo_original>
// kernel: tpu_custom_call.1
$region0: #{tpu_custom_call.1}
  #allocation0 [shape = 'u32[]', space=smem, size = 0x4, offset = 0x4, fixed_abs, tag = 'smem constant byte address 0x4 - core index']
  #allocation1 [shape = 'u32[144,128]{1,0:T(1,128)}', space=vmem, size = 0x12000, scoped, tag = 'internal scratch']
  %s0 = inlined_call_operand.hbm [shape: f32[2,4,16,16], index: 0, kind: input, shape index: {}, may-alias: {0,1}]
  %s1 = inlined_call_operand.hbm [shape: f32[2,4,16,16], index: 1, kind: output, shape index: {}, may-alias: {0,1}]
  %s2 = sld [smem:[#allocation0]]
  $region2: #{tpu_custom_call.1} parent=0
    _
  %s4 = ssub.s32 1, %s2
  %s5 = scalar_select 0, %s4, %s2

// kernel: tpu_custom_call.1
$region0: #{tpu_custom_call.1}
  #allocation0 [shape = 'u32[]', space=smem, size = 0x4, offset = 0x4, fixed_abs, tag = 'smem constant byte address 0x4 - core index']
  #allocation1 [shape = 'u32[144,128]{1,0:T(1,128)}', space=vmem, size = 0x12000, scoped, tag = 'internal scratch']
  %s0 = inlined_call_operand.hbm [shape: f32[2,4,16,16], index: 0, kind: input, shape index: {}, may-alias: {0,1}]
  %s1 = inlined_call_operand.hbm [shape: f32[2,4,16,16], index: 1, kind: output, shape index: {}, may-alias: {0,1}]
  %s2 = sld [smem:[#allocation0]]
  $region18: #{tpu_custom_call.1} parent=0
    _
  %s4 = ssub.s32 1, %s2
  %s5 = scalar_select 0, %s4, %s2
  $region1: #{tpu_custom_call.1} parent=0
    #allocation2 [shape = 'u8[65536]{0}', space=vmem, size = 0x10000, scoped, tag = 'input window, operand 0, single buffered']
    #allocation3 [shape = 's32[1]{0}', space=sflag, size = 0x4, scoped, tag = 'scoped memory for tpu_custom_call.1']
    #allocation4 [shape = 's32[1]{0}', space=sflag, size = 0x4, scoped, tag = 'scoped memory for tpu_custom_call.1']
    #allocation5 [shape = 'u8[65536]{0}', space=vmem, size = 0x10000, scoped, tag = 'output window, operand 0, single buffered']
    %6 = vsyncpa [#allocation3], 0
    %7 = vsyncpa [#allocation4], 0
    // Predicated region
    $region2: #{tpu_custom_call.1} parent=1 // pred_check
      _
    $region3: #{tpu_custom_call.1} parent=1 // pred_check_branch
      %9 = sbr.rel (0) target = $region5
    $region4: #{tpu_custom_call.1} parent=1 // pred_region
      %s11 = ssub.s32 2048, 2048
      %12 = vsyncadd [#allocation3], %s11
      %s13 = sshll.u32 [#allocation2], 4
      %s14 = int_to_ptr.vmem [resolvable:$true] %s13
      %19 = dma.hbm_to_vmem [thread:$0]  %s0, 2048, %s14, [#allocation3], 128, 128, 8
    $region5: #{tpu_custom_call.1} parent=1 // pred_fallthru
      _
    // Predicated region
    $region6: #{tpu_custom_call.1} parent=1 // pred_check
      _
    $region7: #{tpu_custom_call.1} parent=1 // pred_check_branch
      %21 = sbr.rel (0) target = $region9
    $region8: #{tpu_custom_call.1} parent=1 // pred_region
      %22 = dma.done [#allocation3], 2048
    $region9: #{tpu_custom_call.1} parent=1 // pred_fallthru
      _
    %v23 = vld [vmem:[#allocation2] sm:$0xff]
    %v24 = vld [vmem:[#allocation2 + $0x8] sm:$0xff]
    %v25 = vld [vmem:[#allocation2 + $0x10] sm:$0xff]
    %v26 = vld [vmem:[#allocation2 + $0x18] sm:$0xff]
    %v27 = vld [vmem:[#allocation2 + $0x20] sm:$0xff]
    %v28 = vld [vmem:[#allocation2 + $0x28] sm:$0xff]
    %v29 = vld [vmem:[#allocation2 + $0x30] sm:$0xff]
    %v30 = vld [vmem:[#allocation2 + $0x38] sm:$0xff]
    %v31 = vld [vmem:[#allocation2 + $0x40] sm:$0xff]
    %v32 = vld [vmem:[#allocation2 + $0x48] sm:$0xff]
    %v33 = vld [vmem:[#allocation2 + $0x50] sm:$0xff]
    %v34 = vld [vmem:[#allocation2 + $0x58] sm:$0xff]
    %v35 = vld [vmem:[#allocation2 + $0x60] sm:$0xff]
    %v36 = vld [vmem:[#allocation2 + $0x68] sm:$0xff]
    %v37 = vld [vmem:[#allocation2 + $0x70] sm:$0xff]
    %v38 = vld [vmem:[#allocation2 + $0x78] sm:$0xff]
    %vm39 = vcmask 130048
    %40 = vst.msk [vmem:[#allocation5] sm:$0xff] %vm39, %v23
    %41 = vst.msk [vmem:[#allocation5 + $0x8] sm:$0xff] %vm39, %v24
    %42 = vst.msk [vmem:[#allocation5 + $0x10] sm:$0xff] %vm39, %v25
    %43 = vst.msk [vmem:[#allocation5 + $0x18] sm:$0xff] %vm39, %v26
    %44 = vst.msk [vmem:[#allocation5 + $0x20] sm:$0xff] %vm39, %v27
    %45 = vst.msk [vmem:[#allocation5 + $0x28] sm:$0xff] %vm39, %v28
    %46 = vst.msk [vmem:[#allocation5 + $0x30] sm:$0xff] %vm39, %v29
    %47 = vst.msk [vmem:[#allocation5 + $0x38] sm:$0xff] %vm39, %v30
    %48 = vst.msk [vmem:[#allocation5 + $0x40] sm:$0xff] %vm39, %v31
    %49 = vst.msk [vmem:[#allocation5 + $0x48] sm:$0xff] %vm39, %v32
    %50 = vst.msk [vmem:[#allocation5 + $0x50] sm:$0xff] %vm39, %v33
    %51 = vst.msk [vmem:[#allocation5 + $0x58] sm:$0xff] %vm39, %v34
    %52 = vst.msk [vmem:[#allocation5 + $0x60] sm:$0xff] %vm39, %v35
    %53 = vst.msk [vmem:[#allocation5 + $0x68] sm:$0xff] %vm39, %v36
    %54 = vst.msk [vmem:[#allocation5 + $0x70] sm:$0xff] %vm39, %v37
    %55 = vst.msk [vmem:[#allocation5 + $0x78] sm:$0xff] %vm39, %v38
    // Predicated region
    $region10: #{tpu_custom_call.1} parent=1 // pred_check
      _
    $region11: #{tpu_custom_call.1} parent=1 // pred_check_branch
      %57 = sbr.rel (0) target = $region13
    $region12: #{tpu_custom_call.1} parent=1 // pred_region
      %s59 = ssub.s32 2048, 2048
      %60 = vsyncadd [#allocation4], %s59
      %s61 = sshll.u32 [#allocation5], 4
      %s62 = int_to_ptr.vmem [resolvable:$true] %s61
      %67 = dma.vmem_to_hbm [thread:$0]  %s62, 2048, %s1, [#allocation4], 128, 128, 8
    $region13: #{tpu_custom_call.1} parent=1 // pred_fallthru
      _
    // Predicated region
    $region14: #{tpu_custom_call.1} parent=1 // pred_check
      _
    $region15: #{tpu_custom_call.1} parent=1 // pred_check_branch
      %69 = sbr.rel (0) target = $region17
    $region16: #{tpu_custom_call.1} parent=1 // pred_region
      %70 = dma.done [#allocation4], 2048
    $region17: #{tpu_custom_call.1} parent=1 // pred_fallthru
      _
    %71 = vsyncpa [#allocation3], 1
    %72 = vsyncpa [#allocation4], 1

</llo_original>
